<compile_context>
chip_gen: v5e
topology: v5e:2x2
jax: 0.10.0
libtpu: 0.0.40
codegen_flags: <defaults>
</compile_context>

<pallas_src>
import math
import functools

import jax
import jax.numpy as jnp
from jax.experimental import pallas as pl
from jax.experimental.pallas import tpu as pltpu


def _pick_row_tile(ho: int, wo: int, target_m: int = 128) -> int:
    """Largest divisor TH of Ho with TH*Wo <= target_m (falls back to 1).

    Keeps the per-step matmul N-dimension (TH*Wo) around a full 128-lane slab and
    the double-buffered input tiles small enough for v7x's 64 MiB VMEM / v5e's
    scoped limit.
    """
    best = 1
    for th in range(1, ho + 1):
        if ho % th == 0 and th * wo <= target_m:
            best = th
    return best


def _eq_conv2d_kernel(x_ref, w_ref, b_ref, o_ref, *, kh_size, th, wo):
    # x_ref: (TH + KH - 1, Wo, KW*Cin) bf16 -- input rows for this output-row block,
    #        including the (KH-1)-row halo; kw/ci already folded onto the lane axis.
    # w_ref: (KH, Cout, KW*Cin) bf16 -- equalized-lr scale pre-folded.
    # b_ref: (Cout, 1) f32.
    # o_ref: (Cout, TH*Wo) -- lane-dense output block (TH*Wo multiple of 128 here).
    kwc = x_ref.shape[-1]
    cout = w_ref.shape[1]

    x = x_ref[...]                                    # (TH_in, Wo, KW*Cin)
    acc = jnp.zeros((cout, th * wo), dtype=jnp.float32)   # few vregs, lane-dense

    # Static loop over the KH row taps; each is one MXU matmul with a KW*Cin-wide
    # contraction producing the lane-dense (Cout, TH*Wo) partial result.
    for kh in range(kh_size):
        xk = x[kh:kh + th]                            # (TH, Wo, KW*Cin) leading slice
        xk = xk.reshape(th * wo, kwc)                 # merge leading dims, minor kept
        acc += jax.lax.dot_general(
            w_ref[kh], xk,
            dimension_numbers=(((1,), (1,)), ((), ())),    # contract over KW*Cin
            preferred_element_type=jnp.float32)       # (Cout, TH*Wo), f32 accumulation

    acc += b_ref[...]                                 # (Cout, 1) broadcast over lanes
    o_ref[...] = acc.astype(o_ref.dtype)


def equalized_conv2d(x_nchw, weight_oihw, bias, padding: int = 0):
    """Forward pass of EqualizedConv2d. x_nchw: (N, Cin, H, W)."""
    n, cin, h, w = x_nchw.shape
    cout, cin_w, kh, kw = weight_oihw.shape
    assert cin == cin_w, (cin, cin_w)
    c = 1.0 / math.sqrt(cin * kh * kw)                # equalized-lr scale (forward-time)

    ho = h + 2 * padding - kh + 1
    wo = w + 2 * padding - kw + 1
    assert ho > 0 and wo > 0

    th = _pick_row_tile(ho, wo)                       # output rows per grid step
    n_hb = ho // th
    th_in = th + kh - 1                               # rows incl. halo
    kwc = kw * cin

    # ---- XLA-side layout prep (single fused producer pass over x) -------------
    # NCHW -> NHWC, zero-pad, bf16 cast, fold KW taps + Cin onto the lane axis,
    # and cut overlapping output-row blocks with a (KH-1)-row halo.
    x_nhwc = jnp.transpose(x_nchw, (0, 2, 3, 1)).astype(jnp.bfloat16)
    x_pad = jnp.pad(x_nhwc, ((0, 0), (padding, padding), (padding, padding), (0, 0)))
    xr = jnp.concatenate([x_pad[:, :, j:j + wo, :] for j in range(kw)], axis=-1)
    # xr: (N, Hp, Wo, KW*Cin)
    x_blocks = jnp.stack([xr[:, i * th:i * th + th_in] for i in range(n_hb)], axis=1)
    # x_blocks: (N, n_hb, TH_in, Wo, KW*Cin)

    # Weights: (Cout, Cin, KH, KW) -> (KH, Cout, KW*Cin); fold c; bf16 for the MXU.
    w_r = (jnp.transpose(weight_oihw, (2, 0, 3, 1)) * c).reshape(kh, cout, kwc)
    w_r = w_r.astype(jnp.bfloat16)
    b2d = bias.reshape(cout, 1).astype(jnp.float32)

    kernel = functools.partial(_eq_conv2d_kernel, kh_size=kh, th=th, wo=wo)

    flops = 2 * n * ho * wo * kh * kw * cin * cout
    bytes_accessed = (x_blocks.size * 2 + w_r.size * 2 + cout * 4
                      + n * ho * wo * cout * x_nchw.dtype.itemsize)

    out_blk = pl.pallas_call(
        kernel,
        out_shape=jax.ShapeDtypeStruct((n, n_hb, cout, th * wo), x_nchw.dtype),
        grid=(n, n_hb),
        in_specs=[
            # Per-step input row block (with halo); trailing dims are full-extent.
            pl.BlockSpec((None, None, th_in, wo, kwc), lambda i, j: (i, j, 0, 0, 0)),
            # Full (small) weight block, resident across the grid.
            pl.BlockSpec((kh, cout, kwc), lambda i, j: (0, 0, 0)),
            pl.BlockSpec((cout, 1), lambda i, j: (0, 0)),
        ],
        out_specs=pl.BlockSpec((None, None, cout, th * wo), lambda i, j: (i, j, 0, 0)),
        compiler_params=pltpu.CompilerParams(
            dimension_semantics=("parallel", "parallel"),
            vmem_limit_bytes=32 * 1024 * 1024,        # safe on v5e/v6e/v7x
        ),
        cost_estimate=pl.CostEstimate(
            flops=flops, transcendentals=0, bytes_accessed=bytes_accessed),
    )(x_blocks, w_r, b2d)

    # (N, n_hb, Cout, TH*Wo) -> (N, Cout, Ho, Wo) to match the PyTorch convention.
    out = out_blk.reshape(n, n_hb, cout, th, wo)
    out = jnp.transpose(out, (0, 2, 1, 3, 4)).reshape(n, cout, ho, wo)
    return out


if __name__ == "__main__":
    key = jax.random.PRNGKey(0)
    k_x, k_w = jax.random.split(key)

    # Small shapes consistent with the module: batch=2, Cin=4, Cout=8, 16x16, k=3, pad=1.
    N, CIN, COUT, H, W, K, PAD = 2, 4, 8, 16, 16, 3, 1

    x = jax.random.normal(k_x, (N, CIN, H, W), dtype=jnp.float32)
    weight = jax.random.normal(k_w, (COUT, CIN, K, K), dtype=jnp.float32)  # nn.Parameter(randn)
    bias = jnp.ones((COUT,), dtype=jnp.float32)                            # nn.Parameter(ones)

    out = equalized_conv2d(x, weight, bias, padding=PAD)
    out = jax.block_until_ready(out)
    assert out.shape == (N, COUT, H, W), out.shape

    # Reference: XLA conv on the same bf16-rounded operands (the kernel feeds the MXU
    # bf16 inputs with f32 accumulation, so products are exact in f32).
    c = 1.0 / math.sqrt(CIN * K * K)
    x_bf = x.astype(jnp.bfloat16).astype(jnp.float32)
    w_bf = (weight * c).astype(jnp.bfloat16).astype(jnp.float32)
    ref = jax.lax.conv_general_dilated(
        x_bf, w_bf, window_strides=(1, 1), padding=[(PAD, PAD), (PAD, PAD)],
        dimension_numbers=("NCHW", "OIHW", "NCHW"),
        precision=jax.lax.Precision.HIGHEST,
    ) + bias.reshape(1, COUT, 1, 1)

    err = float(jnp.max(jnp.abs(out - ref)))
    assert jnp.allclose(out, ref, atol=1e-3, rtol=1e-3), err

    print("KERNEL_OK")
</pallas_src>

<mosaic_0001>
module attributes {stable_mosaic.version = 11 : i64} {
  func.func @_eq_conv2d_kernel(%arg0: i32, %arg1: i32, %arg2: memref<1x1x10x16x12xbf16, #tpu.memory_space<vmem>>, %arg3: memref<3x8x12xbf16, #tpu.memory_space<vmem>>, %arg4: memref<8x1xf32, #tpu.memory_space<vmem>>, %arg5: memref<1x1x8x128xf32, #tpu.memory_space<vmem>>) attributes {dimension_semantics = [#tpu.dimension_semantics<parallel>, #tpu.dimension_semantics<parallel>], iteration_bounds = array<i64: 2, 2>, scalar_prefetch = 0 : i64, scratch_operands = 0 : i64, tpu.core_type = #tpu.core_type<tc>, window_params = [{transform_indices = @transform_0, window_bounds = array<i64: 1, 1, 10, 16, 12>}, {pipeline_mode = #tpu.pipeline_mode<synchronous>, transform_indices = @transform_1, window_bounds = array<i64: 3, 8, 12>}, {pipeline_mode = #tpu.pipeline_mode<synchronous>, transform_indices = @transform_2, window_bounds = array<i64: 8, 1>}, {transform_indices = @transform_3, window_bounds = array<i64: 1, 1, 8, 128>}]} {
    %c0 = arith.constant 0 : index
    %c0_0 = arith.constant 0 : index
    %c0_1 = arith.constant 0 : index
    %c0_2 = arith.constant 0 : index
    %c0_3 = arith.constant 0 : index
    %0 = vector.load %arg2[%c0, %c0_0, %c0_1, %c0_2, %c0_3] : memref<1x1x10x16x12xbf16, #tpu.memory_space<vmem>>, vector<1x1x10x16x12xbf16>
    %1 = vector.shape_cast %0 : vector<1x1x10x16x12xbf16> to vector<10x16x12xbf16>
    %cst = arith.constant 0.000000e+00 : f32
    %2 = vector.broadcast %cst : f32 to vector<8x128xf32>
    %3 = vector.extract_strided_slice %1 {offsets = [0, 0, 0], sizes = [8, 16, 12], strides = [1, 1, 1]} : vector<10x16x12xbf16> to vector<8x16x12xbf16>
    %4 = vector.shape_cast %3 : vector<8x16x12xbf16> to vector<128x12xbf16>
    %c0_4 = arith.constant 0 : index
    %c0_5 = arith.constant 0 : index
    %c0_6 = arith.constant 0 : index
    %5 = vector.load %arg3[%c0_4, %c0_5, %c0_6] : memref<3x8x12xbf16, #tpu.memory_space<vmem>>, vector<1x8x12xbf16>
    %6 = vector.shape_cast %5 : vector<1x8x12xbf16> to vector<8x12xbf16>
    %cst_7 = arith.constant dense<0.000000e+00> : vector<8x128xf32>
    %7 = tpu.matmul %6, %4, %cst_7 {dimension_numbers = #tpu.dot_dimension_numbers<[1], [1], [0], [0], [0, 0, 1, 0], [], []>} : vector<8x12xbf16>, vector<128x12xbf16>, vector<8x128xf32> -> vector<8x128xf32>
    %8 = arith.addf %2, %7 : vector<8x128xf32>
    %9 = vector.extract_strided_slice %1 {offsets = [1, 0, 0], sizes = [8, 16, 12], strides = [1, 1, 1]} : vector<10x16x12xbf16> to vector<8x16x12xbf16>
    %10 = vector.shape_cast %9 : vector<8x16x12xbf16> to vector<128x12xbf16>
    %c1 = arith.constant 1 : index
    %c0_8 = arith.constant 0 : index
    %c0_9 = arith.constant 0 : index
    %11 = vector.load %arg3[%c1, %c0_8, %c0_9] : memref<3x8x12xbf16, #tpu.memory_space<vmem>>, vector<1x8x12xbf16>
    %12 = vector.shape_cast %11 : vector<1x8x12xbf16> to vector<8x12xbf16>
    %cst_10 = arith.constant dense<0.000000e+00> : vector<8x128xf32>
    %13 = tpu.matmul %12, %10, %cst_10 {dimension_numbers = #tpu.dot_dimension_numbers<[1], [1], [0], [0], [0, 0, 1, 0], [], []>} : vector<8x12xbf16>, vector<128x12xbf16>, vector<8x128xf32> -> vector<8x128xf32>
    %14 = arith.addf %8, %13 : vector<8x128xf32>
    %15 = vector.extract_strided_slice %1 {offsets = [2, 0, 0], sizes = [8, 16, 12], strides = [1, 1, 1]} : vector<10x16x12xbf16> to vector<8x16x12xbf16>
    %16 = vector.shape_cast %15 : vector<8x16x12xbf16> to vector<128x12xbf16>
    %c2 = arith.constant 2 : index
    %c0_11 = arith.constant 0 : index
    %c0_12 = arith.constant 0 : index
    %17 = vector.load %arg3[%c2, %c0_11, %c0_12] : memref<3x8x12xbf16, #tpu.memory_space<vmem>>, vector<1x8x12xbf16>
    %18 = vector.shape_cast %17 : vector<1x8x12xbf16> to vector<8x12xbf16>
    %cst_13 = arith.constant dense<0.000000e+00> : vector<8x128xf32>
    %19 = tpu.matmul %18, %16, %cst_13 {dimension_numbers = #tpu.dot_dimension_numbers<[1], [1], [0], [0], [0, 0, 1, 0], [], []>} : vector<8x12xbf16>, vector<128x12xbf16>, vector<8x128xf32> -> vector<8x128xf32>
    %20 = arith.addf %14, %19 : vector<8x128xf32>
    %c0_14 = arith.constant 0 : index
    %c0_15 = arith.constant 0 : index
    %21 = vector.load %arg4[%c0_14, %c0_15] : memref<8x1xf32, #tpu.memory_space<vmem>>, vector<8x1xf32>
    %22 = vector.broadcast %21 : vector<8x1xf32> to vector<8x128xf32>
    %23 = arith.addf %20, %22 : vector<8x128xf32>
    %c0_16 = arith.constant 0 : index
    %c0_17 = arith.constant 0 : index
    %c0_18 = arith.constant 0 : index
    %c0_19 = arith.constant 0 : index
    %24 = vector.load %arg5[%c0_16, %c0_17, %c0_18, %c0_19] : memref<1x1x8x128xf32, #tpu.memory_space<vmem>>, vector<1x1x8x128xf32>
    %25 = vector.shape_cast %24 : vector<1x1x8x128xf32> to vector<8x128xf32>
    %26 = vector.shape_cast %23 : vector<8x128xf32> to vector<1x1x8x128xf32>
    tpu.vector_store %arg5[%c0_16, %c0_17, %c0_18, %c0_19], %26 {strides = array<i32>} : memref<1x1x8x128xf32, #tpu.memory_space<vmem>>, vector<1x1x8x128xf32>,
    return
  }
  func.func @transform_0(%arg0: i32, %arg1: i32) -> (i32, i32, i32, i32, i32) {
    %c0_i32 = arith.constant 0 : i32
    %c0_i32_0 = arith.constant 0 : i32
    %c0_i32_1 = arith.constant 0 : i32
    %c0_i32_2 = arith.constant 0 : i32
    return %arg0, %arg1, %c0_i32, %c0_i32_0, %c0_i32_1 : i32, i32, i32, i32, i32
  }
  func.func @transform_1(%arg0: i32, %arg1: i32) -> (i32, i32, i32) {
    %c0_i32 = arith.constant 0 : i32
    %c0_i32_0 = arith.constant 0 : i32
    %c0_i32_1 = arith.constant 0 : i32
    %c0_i32_2 = arith.constant 0 : i32
    return %c0_i32, %c0_i32_0, %c0_i32_1 : i32, i32, i32
  }
  func.func @transform_2(%arg0: i32, %arg1: i32) -> (i32, i32) {
    %c0_i32 = arith.constant 0 : i32
    %c0_i32_0 = arith.constant 0 : i32
    %c0_i32_1 = arith.constant 0 : i32
    return %c0_i32, %c0_i32_0 : i32, i32
  }
  func.func @transform_3(%arg0: i32, %arg1: i32) -> (i32, i32, i32, i32) {
    %c0_i32 = arith.constant 0 : i32
    %c0_i32_0 = arith.constant 0 : i32
    %c0_i32_1 = arith.constant 0 : i32
    return %arg0, %arg1, %c0_i32, %c0_i32_0 : i32, i32, i32, i32
  }
}

</mosaic_0001>

<llo_original>
// kernel: tpu_custom_call.1
$region0: #{tpu_custom_call.1}
  #allocation0 [shape = 'u32[]', space=smem, size = 0x4, offset = 0x4, fixed_abs, tag = 'smem constant byte address 0x4 - core index']
  #allocation1 [shape = 'u32[72,128]{1,0:T(1,128)}', space=vmem, size = 0x9000, scoped, tag = 'internal scratch']
  %s0 = inlined_call_operand.vmem [shape: bf16[2,2,10,16,12], index: 0, kind: input, shape index: {}]
  %s1 = inlined_call_operand.vmem [shape: bf16[3,8,12], index: 1, kind: input, shape index: {}]
  %s2 = inlined_call_operand.vmem [shape: f32[8,1], index: 2, kind: input, shape index: {}]
  %s3 = inlined_call_operand.hbm [shape: f32[2,2,8,128], index: 3, kind: output, shape index: {}]
  %s4 = sld [smem:[#allocation0]]
  $region45: #{tpu_custom_call.1} parent=0
    _
  %s6 = ssub.s32 1, %s4
  %s7 = scalar_select 0, %s6, %s4
  $region1: #{tpu_custom_call.1} parent=0
    #allocation2 [shape = 'u8[8192]{0}', space=vmem, size = 0x2000, scoped, tag = 'output window, operand 0']
    #allocation3 [shape = 's32[2]{0}', space=sflag, size = 0x8, scoped, tag = 'scoped memory for tpu_custom_call.1']
    %8 = vsyncpa [#allocation3], 0
    %s9 = scalar_lea.sflag [#allocation3], 1
    %10 = vsyncpa %s9, 0
    loop: start=0, step=1, limit=6
    $region2: #{tpu_custom_call.1} parent=1 // loop_pre_header
      _
    $region3: #{tpu_custom_call.1} parent=1 // loop_header
      %s12 = sphi 0, %s16
      %p13 = scmp.ge.s32.totalorder %s12, 6
      %s19 = sphi 0, %s31
      %s20 = sphi 0, %s27
      %s21 = sphi 0, %s19
      %s22 = sphi 0, %s20
      %s23 = sphi 0, %s21
      %s24 = sphi 0, %s22
      %s36 = sphi 0, %s38
      %s39 = sphi 0, %s36
      %s40 = sphi 0, %s39
      %s56 = sphi 0, %s40
      %s60 = sphi 0, %s60
      %s62 = sphi 0, %s60
      %s63 = sphi 0, %s62
      %s77 = sphi 0, %s63
      %s81 = sphi 0, %s81
      %s83 = sphi 0, %s81
      %s84 = sphi 0, %s83
      %s98 = sphi 0, %s84
      %s106 = sphi 0, %s108
      %s109 = sphi 0, %s106
      %s110 = sphi 0, %s109
      %s126 = sphi 0, %s110
    $region4: #{tpu_custom_call.1} parent=1 // loop_header_branch
      %15 = sbr.rel (%p13) target = $region8
    $region5: #{tpu_custom_call.1} parent=1 // loop_body
      %s17 = ssub.s32 %s12, 1
      %s18 = ssub.s32 %s12, 2
      %s25 = sadd.s32 1, %s20
      %p26 = scmp.ge.s32.totalorder %s25, 2
      %s27 = scalar_select %p26, 0, %s25
      %s28 = sadd.s32 1, %s19
      %s29 = scalar_select %p26, %s28, %s19
      %p30 = scmp.ge.s32.totalorder %s29, 2
      %s31 = scalar_select %p30, 0, %s29
      %s32 = ssub.s32 %s19, %s31
      %s33 = ssub.s32 %s20, %s27
      %s34 = sor.u32 %s32, %s33
      %p35 = scmp.eq.s32.totalorder %s34, 0
      %s37 = sadd.s32 %s36, 1
      %s38 = scalar_select %p35, %s36, %s37
      %p41 = pneg %p35
      %p42 = scmp.eq.s32.totalorder %s12, 3
      %p43 = por %p41, %p42
      %p44 = scmp.ne.s32.totalorder %s36, %s39
      %p45 = scmp.eq.s32.totalorder %s12, 0
      %p46 = por %p44, %p45
      %p47 = scmp.ne.s32.totalorder %s36, %s39
      %p48 = scmp.eq.s32.totalorder %s17, 3
      %p49 = por %p47, %p48
      %p50 = scmp.ne.s32.totalorder %s39, %s40
      %p51 = scmp.eq.s32.totalorder %s17, 0
      %p52 = por %p50, %p51
      %p53 = scmp.ne.s32.totalorder %s39, %s40
      %p54 = scmp.eq.s32.totalorder %s18, 3
      %p55 = por %p53, %p54
      %p57 = scmp.ne.s32.totalorder %s40, %s56
      %p58 = scmp.eq.s32.totalorder %s18, 0
      %p59 = por %p57, %p58
      %s61 = sadd.s32 %s60, 1
      %p64 = scmp.eq.s32.totalorder %s12, 3
      %p65 = scmp.ne.s32.totalorder %s60, %s62
      %p66 = scmp.eq.s32.totalorder %s12, 0
      %p67 = por %p65, %p66
      %p68 = scmp.ne.s32.totalorder %s60, %s62
      %p69 = scmp.eq.s32.totalorder %s17, 3
      %p70 = por %p68, %p69
      %p71 = scmp.ne.s32.totalorder %s62, %s63
      %p72 = scmp.eq.s32.totalorder %s17, 0
      %p73 = por %p71, %p72
      %p74 = scmp.ne.s32.totalorder %s62, %s63
      %p75 = scmp.eq.s32.totalorder %s18, 3
      %p76 = por %p74, %p75
      %p78 = scmp.ne.s32.totalorder %s63, %s77
      %p79 = scmp.eq.s32.totalorder %s18, 0
      %p80 = por %p78, %p79
      %s82 = sadd.s32 %s81, 1
      %p85 = scmp.eq.s32.totalorder %s12, 3
      %p86 = scmp.ne.s32.totalorder %s81, %s83
      %p87 = scmp.eq.s32.totalorder %s12, 0
      %p88 = por %p86, %p87
      %p89 = scmp.ne.s32.totalorder %s81, %s83
      %p90 = scmp.eq.s32.totalorder %s17, 3
      %p91 = por %p89, %p90
      %p92 = scmp.ne.s32.totalorder %s83, %s84
      %p93 = scmp.eq.s32.totalorder %s17, 0
      %p94 = por %p92, %p93
      %p95 = scmp.ne.s32.totalorder %s83, %s84
      %p96 = scmp.eq.s32.totalorder %s18, 3
      %p97 = por %p95, %p96
      %p99 = scmp.ne.s32.totalorder %s84, %s98
      %p100 = scmp.eq.s32.totalorder %s18, 0
      %p101 = por %p99, %p100
      %s102 = ssub.s32 %s19, %s31
      %s103 = ssub.s32 %s20, %s27
      %s104 = sor.u32 %s102, %s103
      %p105 = scmp.eq.s32.totalorder %s104, 0
      %s107 = sadd.s32 %s106, 1
      %s108 = scalar_select %p105, %s106, %s107
      %p111 = pneg %p105
      %p112 = scmp.eq.s32.totalorder %s12, 3
      %p113 = por %p111, %p112
      %p114 = scmp.ne.s32.totalorder %s106, %s109
      %p115 = scmp.eq.s32.totalorder %s12, 0
      %p116 = por %p114, %p115
      %p117 = scmp.ne.s32.totalorder %s106, %s109
      %p118 = scmp.eq.s32.totalorder %s17, 3
      %p119 = por %p117, %p118
      %p120 = scmp.ne.s32.totalorder %s109, %s110
      %p121 = scmp.eq.s32.totalorder %s17, 0
      %p122 = por %p120, %p121
      %p123 = scmp.ne.s32.totalorder %s109, %s110
      %p124 = scmp.eq.s32.totalorder %s18, 3
      %p125 = por %p123, %p124
      %p127 = scmp.ne.s32.totalorder %s110, %s126
      %p128 = scmp.eq.s32.totalorder %s18, 0
      %p129 = por %p127, %p128
      %p130 = scmp.le.s32.totalorder 1, %s12
      %p131 = scmp.lt.s32.totalorder %s12, 5
      %p132 = pnand %p130, %p131
      %p133 = pneg %p132
      // Predicated region
      $region9: #{tpu_custom_call.1} parent=5 // pred_check
        _
      $region10: #{tpu_custom_call.1} parent=5 // pred_check_branch
        %135 = sbr.rel (%p132) target = $region12
      $region11: #{tpu_custom_call.1} parent=5 // pred_region
        %s136 = ssub.s32 %s12, 1
        // Predicated region
        $region13: #{tpu_custom_call.1} parent=11 // pred_check
          %p137 = pneg %p73
        $region14: #{tpu_custom_call.1} parent=11 // pred_check_branch
          %139 = sbr.rel (%p137) target = $region16
        $region15: #{tpu_custom_call.1} parent=11 // pred_region
          _
        $region16: #{tpu_custom_call.1} parent=11 // pred_fallthru
          _
        // Predicated region
        $region17: #{tpu_custom_call.1} parent=11 // pred_check
          %p140 = pneg %p94
        $region18: #{tpu_custom_call.1} parent=11 // pred_check_branch
          %142 = sbr.rel (%p140) target = $region20
        $region19: #{tpu_custom_call.1} parent=11 // pred_region
          _
        $region20: #{tpu_custom_call.1} parent=11 // pred_fallthru
          _
      $region12: #{tpu_custom_call.1} parent=5 // pred_fallthru
        _
      %p143 = scmp.lt.s32.totalorder %s12, 4
      // Predicated region
      $region21: #{tpu_custom_call.1} parent=5 // pred_check
        %p144 = pneg %p143
      $region22: #{tpu_custom_call.1} parent=5 // pred_check_branch
        %146 = sbr.rel (%p144) target = $region24
      $region23: #{tpu_custom_call.1} parent=5 // pred_region
        // Predicated region
        $region25: #{tpu_custom_call.1} parent=23 // pred_check
          %p147 = pneg %p46
        $region26: #{tpu_custom_call.1} parent=23 // pred_check_branch
          %149 = sbr.rel (%p147) target = $region28
        $region27: #{tpu_custom_call.1} parent=23 // pred_region
          %p150 = scmp.lt.s32.totalorder %s19, 1
          %s151 = scalar_select %p150, %s19, 1
          %p152 = scmp.lt.s32.totalorder %s20, 1
          %s153 = scalar_select %p152, %s20, 1
          %s154 = smul.addr %s153, 20
          %s155 = smul.addr %s151, 40
          %s156 = sadd.s32 %s154, %s155
          %s157 = smul.addr %s156, 4
          %s158 = scalar_lea.vmem %s0, %s157
        $region28: #{tpu_custom_call.1} parent=23 // pred_fallthru
          _
      $region24: #{tpu_custom_call.1} parent=5 // pred_fallthru
        _
      %p159 = scmp.le.s32.totalorder 1, %s12
      %p160 = scmp.lt.s32.totalorder %s12, 5
      %p161 = pnand %p159, %p160
      %p162 = pneg %p161
      // Predicated region
      $region29: #{tpu_custom_call.1} parent=5 // pred_check
        _
      $region30: #{tpu_custom_call.1} parent=5 // pred_check_branch
        %164 = sbr.rel (%p161) target = $region32
      $region31: #{tpu_custom_call.1} parent=5 // pred_region
        %s165 = ssub.s32 %s12, 1
        %p166 = scmp.lt.s32.totalorder %s21, 1
        %s167 = scalar_select %p166, %s21, 1
        %p168 = scmp.lt.s32.totalorder %s22, 1
        %s169 = scalar_select %p168, %s22, 1
        %s170 = smul.addr %s169, 20
        %s171 = smul.addr %s167, 40
        %s172 = sadd.s32 %s170, %s171
        %s173 = smul.addr %s172, 4
        %s174 = scalar_lea.vmem %s0, %s173
        %p175 = pneg %p52
        %p176 = pneg %p49
        %p177 = pneg %p73
        %p178 = pneg %p70
        %p179 = pneg %p94
        %p180 = pneg %p91
        %p181 = pneg %p122
        %p182 = pneg %p119
        %s183 = sand.u32 %s109, 1
        %s184 = scalar_lea.sflag [#allocation3], %s183
        %s185 = sand.u32 %s109, 1
        %s186 = smul.addr %s185, 8
        %s187 = scalar_lea.vmem [#allocation2], %s186
        %p188 = scmp.lt.s32.totalorder %s21, 1
        %s189 = scalar_select %p188, %s21, 1
        %p190 = scmp.lt.s32.totalorder %s22, 1
        %s191 = scalar_select %p190, %s22, 1
        %s192 = smul.addr %s191, 20
        %s193 = smul.addr %s189, 40
        %s194 = sadd.s32 %s192, %s193
        %s195 = smul.addr %s194, 4
        %s196 = scalar_lea.vmem %s0, %s195
        %v197 = vld [vmem:[%s196] sm:$0xf]
        %v198 = vld [vmem:[%s196 + $0x4] sm:$0xf]
        %v199 = vld [vmem:[%s196 + $0x8] sm:$0xf]
        %v200 = vld [vmem:[%s196 + $0xc] sm:$0xf]
        %v201 = vld [vmem:[%s196 + $0x10] sm:$0xf]
        %v202 = vld [vmem:[%s196 + $0x14] sm:$0xf]
        %v203 = vld [vmem:[%s196 + $0x18] sm:$0xf]
        %v204 = vld [vmem:[%s196 + $0x1c] sm:$0xf]
        %v205 = vld [vmem:[%s196 + $0x20] sm:$0xf]
        %v206 = vld [vmem:[%s196 + $0x24] sm:$0xf]
        %v207 = vld [vmem:[%s196 + $0x28] sm:$0xf]
        %v208 = vld [vmem:[%s196 + $0x2c] sm:$0xf]
        %v209 = vld [vmem:[%s196 + $0x30] sm:$0xf]
        %v210 = vld [vmem:[%s196 + $0x34] sm:$0xf]
        %v211 = vld [vmem:[%s196 + $0x38] sm:$0xf]
        %v212 = vld [vmem:[%s196 + $0x3c] sm:$0xf]
        %v213 = vld [vmem:[%s196 + $0x40] sm:$0xf]
        %v214 = vld [vmem:[%s196 + $0x44] sm:$0xf]
        %v215 = vld [vmem:[%s196 + $0x48] sm:$0xf]
        %v216 = vld [vmem:[%s196 + $0x4c] sm:$0xf]
        %v217 = vld [vmem:[%s1] sm:$0xf]
        %s218 = scalar_lea.vmem %s1, 4
        %v219 = vld [vmem:[%s218] sm:$0xf]
        %v236 = vunpack.c.l.b16 %v199
        %v237 = vunpack.c.l.b16 %v200
        %v238 = vunpack.c.l.b16 %v201
        %v239 = vunpack.c.l.b16 %v202
        %v240 = vunpack.c.l.b16 %v203
        %v241 = vunpack.c.l.b16 %v204
        %v242 = vunpack.c.l.b16 %v205
        %v243 = vunpack.c.l.b16 %v206
        %v244 = vunpack.c.l.b16 %v207
        %v245 = vunpack.c.l.b16 %v208
        %v246 = vunpack.c.l.b16 %v209
        %v247 = vunpack.c.l.b16 %v210
        %v248 = vunpack.c.l.b16 %v211
        %v249 = vunpack.c.l.b16 %v212
        %v250 = vunpack.c.l.b16 %v213
        %v251 = vunpack.c.l.b16 %v214
        %v252 = vpack.c.b16 %v237, %v236
        %v253 = vpack.c.b16 %v239, %v238
        %v254 = vpack.c.b16 %v241, %v240
        %v255 = vpack.c.b16 %v243, %v242
        %v256 = vpack.c.b16 %v245, %v244
        %v257 = vpack.c.b16 %v247, %v246
        %v258 = vpack.c.b16 %v249, %v248
        %v259 = vpack.c.b16 %v251, %v250
        %vm260 = vcmask 97280
        %v262 = vsel %vm260, %v219, 0
        %v265 = vsel %vm260, %v252, 0
        %v268 = vsel %vm260, %v253, 0
        %v271 = vsel %vm260, %v254, 0
        %v274 = vsel %vm260, %v255, 0
        %v277 = vsel %vm260, %v256, 0
        %v280 = vsel %vm260, %v257, 0
        %v283 = vsel %vm260, %v258, 0
        %v286 = vsel %vm260, %v259, 0
        %288 = vmatpush.bf16.xpose.msra.mxu0 %v286
        %289 = vmatpush.bf16.xpose.msra.mxu0 %v283
        %290 = vmatpush.bf16.xpose.msra.mxu0 %v280
        %291 = vmatpush.bf16.xpose.msra.mxu0 %v277
        %292 = vmatpush.bf16.xpose.msra.mxu0 %v274
        %293 = vmatpush.bf16.xpose.msra.mxu0 %v271
        %294 = vmatpush.bf16.xpose.msra.mxu0 %v268
        %295 = vmatpush.bf16.xpose.msra.mxu0 %v265
        %296 = vmatmul.bf16.gmra.mxu0 %v262
        %v297 = vpop.f32.mrf.mxu0
        %v298 = vadd.f32 0.0, %v297
        %v299 = vpop.f32.mrf.mxu0
        %300 = vdwg.mxu0
        %v303 = vunpack.c.l.b16 %v197
        %v304 = vunpack.c.l.b16 %v198
        %v305 = vpack.c.b16 %v304, %v303
        %v307 = vsel %vm260, %v217, 0
        %v310 = vsel %vm260, %v305, 0
        %312 = vmatpush.bf16.xpose.msra.mxu0 %v283
        %313 = vmatpush.bf16.xpose.msra.mxu0 %v280
        %314 = vmatpush.bf16.xpose.msra.mxu0 %v277
        %315 = vmatpush.bf16.xpose.msra.mxu0 %v274
        %316 = vmatpush.bf16.xpose.msra.mxu0 %v271
        %317 = vmatpush.bf16.xpose.msra.mxu0 %v268
        %318 = vmatpush.bf16.xpose.msra.mxu0 %v265
        %319 = vmatpush.bf16.xpose.msra.mxu0 %v310
        %320 = vmatmul.bf16.gmra.mxu0 %v307
        %v321 = vpop.f32.mrf.mxu0
        %v322 = vadd.f32 %v298, %v321
        %v323 = vpop.f32.mrf.mxu0
        %324 = vdwg.mxu0
        %s325 = scalar_lea.vmem %s1, 8
        %v326 = vld [vmem:[%s325] sm:$0xf]
        %v329 = vunpack.c.l.b16 %v215
        %v330 = vunpack.c.l.b16 %v216
        %v331 = vpack.c.b16 %v330, %v329
        %v333 = vsel %vm260, %v326, 0
        %v336 = vsel %vm260, %v331, 0
        %338 = vmatpush.bf16.xpose.msra.mxu0 %v336
        %339 = vmatpush.bf16.xpose.msra.mxu0 %v286
        %340 = vmatpush.bf16.xpose.msra.mxu0 %v283
        %341 = vmatpush.bf16.xpose.msra.mxu0 %v280
        %342 = vmatpush.bf16.xpose.msra.mxu0 %v277
        %343 = vmatpush.bf16.xpose.msra.mxu0 %v274
        %344 = vmatpush.bf16.xpose.msra.mxu0 %v271
        %345 = vmatpush.bf16.xpose.msra.mxu0 %v268
        %346 = vmatmul.bf16.gmra.mxu0 %v333
        %v347 = vpop.f32.mrf.mxu0
        %v348 = vadd.f32 0.0, %v347
        %v349 = vpop.f32.mrf.mxu0
        %350 = vdwg.mxu0
        %v351 = vadd.f32 %v322, %v348
        %v352 = vld [vmem:[%s2] sm:$0xff]
        %354 = vset.pattern.permute.xlu0 0
        %355 = vperm.xlu0 %354, %v352
        %v356 = vpop.permute.xlu0 %355
        %v358 = vadd.f32 %v351, %v356
        %359 = vst [vmem:[%s187] sm:$0xff] %v358
        %s360 = sand.u32 %s109, 1
        %s361 = scalar_lea.sflag [#allocation3], %s360
        %s362 = sand.u32 %s109, 1
        %s363 = smul.addr %s362, 8
        %s364 = scalar_lea.vmem [#allocation2], %s363
        // Predicated region
        $region33: #{tpu_custom_call.1} parent=31 // pred_check
          %p365 = pneg %p119
        $region34: #{tpu_custom_call.1} parent=31 // pred_check_branch
          %367 = sbr.rel (%p365) target = $region36
        $region35: #{tpu_custom_call.1} parent=31 // pred_region
          %369 = vsyncadd %s361, 0
          %s370 = smul.addr %s21, 2
          %s371 = sadd.s32 %s22, %s370
          %s372 = smul.addr %s371, 8
          %s373 = scalar_lea.hbm %s3, %s372
          %s375 = sshll.u32 %s364, 4
          %s376 = int_to_ptr.vmem [resolvable:$true] %s375
          %s377 = sshll.u32 %s373, 4
          %s378 = int_to_ptr.hbm [resolvable:$true] %s377
          %380 = dma.vmem_to_hbm [thread:$0]  %s376, 128, %s378, %s361
        $region36: #{tpu_custom_call.1} parent=31 // pred_fallthru
          _
      $region32: #{tpu_custom_call.1} parent=5 // pred_fallthru
        _
      %p381 = scmp.le.s32.totalorder 2, %s12
      // Predicated region
      $region37: #{tpu_custom_call.1} parent=5 // pred_check
        %p382 = pneg %p381
      $region38: #{tpu_custom_call.1} parent=5 // pred_check_branch
        %384 = sbr.rel (%p382) target = $region40
      $region39: #{tpu_custom_call.1} parent=5 // pred_region
        %s385 = ssub.s32 %s12, 2
        // Predicated region
        $region41: #{tpu_custom_call.1} parent=39 // pred_check
          %p386 = pneg %p125
        $region42: #{tpu_custom_call.1} parent=39 // pred_check_branch
          %388 = sbr.rel (%p386) target = $region44
        $region43: #{tpu_custom_call.1} parent=39 // pred_region
          %s389 = sand.u32 %s110, 1
          %s390 = scalar_lea.sflag [#allocation3], %s389
          %s391 = sand.u32 %s110, 1
          %s392 = smul.addr %s391, 8
          %s393 = scalar_lea.vmem [#allocation2], %s392
          %395 = dma.done %s390, 128
        $region44: #{tpu_custom_call.1} parent=39 // pred_fallthru
          _
      $region40: #{tpu_custom_call.1} parent=5 // pred_fallthru
        _
    $region6: #{tpu_custom_call.1} parent=1 // loop_footer
      %s16 = sadd.s32 1, %s12
    $region7: #{tpu_custom_call.1} parent=1 // loop_footer_branch
      %11 = sbr.rel target = $region3
    $region8: #{tpu_custom_call.1} parent=1 // loop_exit
      _
    %396 = vsyncpa [#allocation3], 1
    %s397 = scalar_lea.sflag [#allocation3], 1
    %398 = vsyncpa %s397, 1

</llo_original>
